<compile_context>
chip_gen: v7x
topology: tpu7x:2x2x1
jax: 0.10.0
libtpu: 0.0.40
codegen_flags: <defaults>
</compile_context>

<pallas_src>
import jax
import jax.numpy as jnp
from jax import lax
from jax.experimental import pallas as pl
from jax.experimental.pallas import tpu as pltpu


def _make_neumf_kernel(num_layers):
    """Build a NeuMF kernel for a fixed number of MLP layers.

    Ref order:
      emb_u [TB, 2F]  (fused [p_mf | p_mlp] rows, batch-major, bf16/f32)
      emb_i [TB, 2F]  (fused [q_mf | q_mlp] rows)
      w0u_ext [H0, 2F], w0v_ext [H0, 2F]  (MF half zero-padded), b0 [H0, 1]
      (w_l [H_l, H_{l-1}], b_l [H_l, 1])  for l = 1 .. num_layers-1
      wpg_ext [1, 2F]  (MLP half zero-padded), wpx [H_last, 1]
      out   [1, TB]
    """

    # Contract the feature (last) dim of both operands: result [lhs_rows, TB].
    dn = (((1,), (1,)), ((), ()))

    def kernel(*refs):
        emb_u_ref, emb_i_ref = refs[0], refs[1]
        w0u_ref, w0v_ref, b0_ref = refs[2], refs[3], refs[4]
        layer_refs = refs[5:5 + 2 * (num_layers - 1)]
        wpg_ref = refs[5 + 2 * (num_layers - 1)]
        wpx_ref = refs[6 + 2 * (num_layers - 1)]
        out_ref = refs[-1]

        # Upcast streamed (possibly bf16) embeddings once; all compute in f32.
        eu = emb_u_ref[...].astype(jnp.float32)      # [TB, 2F]
        ei = emb_i_ref[...].astype(jnp.float32)      # [TB, 2F]

        # GMF branch fused with its prediction weights.  prod's upper-half lanes hold
        # p_mlp*q_mlp, but wpg_ext is zero there, so one MXU dot yields the exact
        # w_pred[:, :F] @ (p_mf * q_mf) contribution as a lane-dense (1, TB) row.
        prod = eu * ei                                                           # VPU
        gmf_out = lax.dot_general(wpg_ref[...], prod, dn,
                                  preferred_element_type=jnp.float32)           # [1, TB]

        # MLP branch.  First layer acts directly on the fused batch-major rows; the
        # zero-padded weights select the p_mlp / q_mlp halves, so there is no
        # lane-axis concat, slice or transpose anywhere.
        x = (lax.dot_general(w0u_ref[...], eu, dn, preferred_element_type=jnp.float32)
             + lax.dot_general(w0v_ref[...], ei, dn, preferred_element_type=jnp.float32)
             + b0_ref[...])
        x = jnp.maximum(x, 0.0)                                                  # [H0, TB]

        for l in range(num_layers - 1):
            w = layer_refs[2 * l][...]               # [H_l, H_{l-1}]
            b = layer_refs[2 * l + 1][...]           # [H_l, 1]
            x = jnp.maximum(jnp.dot(w, x, preferred_element_type=jnp.float32) + b, 0.0)

        # Prediction: GMF dot + VPU multiply / sublane reduce for the MLP branch.
        out_ref[...] = gmf_out + jnp.sum(x * wpx_ref[...], axis=0, keepdims=True)

    return kernel


def neumf_forward(user_id, item_id, params, *, batch_tile=1024,
                  emb_dtype=jnp.bfloat16):
    """NeuMF forward.  Embedding gathers in JAX glue; everything else in Pallas."""
    P, Q, U, V = params["P"], params["Q"], params["U"], params["V"]
    mlp_layers = params["mlp"]          # list of (W [out, in], b [out])  (PyTorch layout)
    w_pred = params["w_pred"]           # [1, num_factors + H_last]       (bias=False)

    num_factors = P.shape[1]
    num_layers = len(mlp_layers)
    assert num_layers >= 1
    assert batch_tile % 128 == 0, "batch_tile must be lane-aligned (prefer multiples of 256)"

    # Shape-consistency checks implied by the module's forward().
    assert mlp_layers[0][0].shape[1] == 2 * num_factors, \
        "first MLP layer must take the concatenated (2 * num_factors) MLP embeddings"
    for l in range(1, num_layers):
        assert mlp_layers[l][0].shape[1] == mlp_layers[l - 1][0].shape[0], \
            "MLP layer widths are not shape-consistent"
    h0 = mlp_layers[0][0].shape[0]
    h_last = mlp_layers[-1][0].shape[0]
    assert w_pred.shape == (1, num_factors + h_last)

    # Fused embedding tables: [P | U] per user row, [Q | V] per item row.
    pu_tbl = jnp.concatenate([P, U], axis=1).astype(emb_dtype)   # [num_users, 2F]
    qv_tbl = jnp.concatenate([Q, V], axis=1).astype(emb_dtype)   # [num_items, 2F]

    batch = user_id.shape[0]
    padded = pl.cdiv(batch, batch_tile) * batch_tile
    pad = padded - batch
    uid = jnp.pad(user_id, (0, pad))
    iid = jnp.pad(item_id, (0, pad))

    # One gather per id, batch-major, no wrapper-side transposes.
    # TODO(synk): fuse these gathers into the kernel via scalar prefetch + DMA gather.
    emb_u = jnp.take(pu_tbl, uid, axis=0)     # [padded, 2F]
    emb_i = jnp.take(qv_tbl, iid, axis=0)     # [padded, 2F]

    # Static weight prep (all f32, VMEM-resident across the grid).
    f = jnp.float32
    zeros_half = jnp.zeros((h0, num_factors), f)
    w0, b0 = mlp_layers[0]
    w0u_ext = jnp.concatenate([zeros_half, w0[:, :num_factors].astype(f)], axis=1)
    w0v_ext = jnp.concatenate([zeros_half, w0[:, num_factors:].astype(f)], axis=1)
    wpg_ext = jnp.concatenate([w_pred[:, :num_factors].astype(f),
                               jnp.zeros((1, num_factors), f)], axis=1)
    wpx = w_pred[:, num_factors:].T.astype(f)

    weight_args = [w0u_ext, w0v_ext, b0.reshape(-1, 1).astype(f)]
    for w, b in mlp_layers[1:]:
        weight_args.extend([w.astype(f), b.reshape(-1, 1).astype(f)])
    weight_args.extend([wpg_ext, wpx])

    grid = (padded // batch_tile,)

    emb_spec = pl.BlockSpec((batch_tile, 2 * num_factors), lambda i: (i, 0))
    weight_specs = [pl.BlockSpec(a.shape, lambda i: (0, 0)) for a in weight_args]
    out_spec = pl.BlockSpec((1, batch_tile), lambda i: (0, i))

    # Advisory cost estimate: bytes dominated by the two embedding streams.
    emb_bytes = 2 * padded * 2 * num_factors * jnp.dtype(emb_dtype).itemsize
    weight_bytes = sum(int(a.size) * 4 for a in weight_args)
    flops_per_row = 2 * (2 * num_factors) * (2 * h0 + 1)     # first-layer + GMF dots
    flops_per_row += 2 * num_factors                          # GMF elementwise product
    for l in range(1, num_layers):
        flops_per_row += 2 * mlp_layers[l][0].shape[1] * mlp_layers[l][0].shape[0]
    flops_per_row += 2 * h_last                               # prediction reduce
    cost = pl.CostEstimate(flops=padded * flops_per_row, transcendentals=0,
                           bytes_accessed=emb_bytes + weight_bytes + padded * 4)

    kernel = _make_neumf_kernel(num_layers)

    out = pl.pallas_call(
        kernel,
        out_shape=jax.ShapeDtypeStruct((1, padded), jnp.float32),
        grid=grid,
        in_specs=[emb_spec, emb_spec] + weight_specs,
        out_specs=out_spec,
        compiler_params=pltpu.CompilerParams(
            dimension_semantics=("parallel",),        # 2 TensorCores on v7x
            vmem_limit_bytes=32 * 1024 * 1024,        # safe on v5e/v6e/v7x
        ),
        cost_estimate=cost,
    )(emb_u, emb_i, *weight_args)

    return out[:, :batch].T      # [batch, 1]


def init_params(key, num_users, num_items, num_factors, input_size, nums_hiddens):
    """Deterministic synthetic parameter init (matches shapes of the nn.Module)."""
    keys = jax.random.split(key, 5 + 2 * len(nums_hiddens))
    k_iter = iter(keys)

    def nrm(k, shape, scale=0.1):
        return (scale * jax.random.normal(k, shape)).astype(jnp.float32)

    params = {
        "P": nrm(next(k_iter), (num_users, num_factors)),
        "Q": nrm(next(k_iter), (num_items, num_factors)),
        "U": nrm(next(k_iter), (num_users, num_factors)),
        "V": nrm(next(k_iter), (num_items, num_factors)),
    }

    mlp = []
    for h in nums_hiddens:
        # PyTorch: Linear(input_size, h) for every layer (as written in the module).
        w = nrm(next(k_iter), (h, input_size))   # PyTorch weight layout [out, in]
        b = nrm(next(k_iter), (h,))
        mlp.append((w, b))
    params["mlp"] = mlp

    # Prediction layer applied to cat(gmf, mlp): [1, num_factors + H_last], bias=False.
    params["w_pred"] = nrm(next(k_iter), (1, num_factors + nums_hiddens[-1]))
    return params


def reference_forward(user_id, item_id, params, emb_dtype=jnp.float32):
    """Plain-JAX reference (batch-major).  emb_dtype reproduces the kernel's storage
    precision for the embedding tables (compute stays f32, like the kernel)."""
    def tbl(t):
        return t.astype(emb_dtype).astype(jnp.float32)

    p_mf = tbl(params["P"])[user_id]
    q_mf = tbl(params["Q"])[item_id]
    gmf = p_mf * q_mf
    x = jnp.concatenate([tbl(params["U"])[user_id], tbl(params["V"])[item_id]], axis=1)
    for w, b in params["mlp"]:
        x = jnp.maximum(x @ w.T + b, 0.0)
    con = jnp.concatenate([gmf, x], axis=1)
    return con @ params["w_pred"].T


if __name__ == "__main__":
    # Small config consistent with the module's forward:
    #   input_size must equal 2*num_factors, hidden sizes equal input_size.
    num_users = 48
    num_items = 96
    num_factors = 16
    input_size = 2 * num_factors            # 32
    nums_hiddens = (32, 32)                 # each Linear(input_size, h)
    batch = 1000                            # deliberately not a tile multiple
    batch_tile = 256                        # 256-aligned; padded=1024 -> 4 grid steps

    key = jax.random.PRNGKey(0)
    k_params, k_u, k_i = jax.random.split(key, 3)
    params = init_params(k_params, num_users, num_items, num_factors,
                         input_size, nums_hiddens)

    user_id = jax.random.randint(k_u, (batch,), 0, num_users, dtype=jnp.int32)
    item_id = jax.random.randint(k_i, (batch,), 0, num_items, dtype=jnp.int32)

    fwd = jax.jit(neumf_forward, static_argnames=("batch_tile", "emb_dtype"))

    # bf16 embedding storage (default fast path), f32 compute; reference uses the
    # same bf16-rounded tables so only fp summation-order differences remain.
    out_bf16 = jax.block_until_ready(
        fwd(user_id, item_id, params, batch_tile=batch_tile, emb_dtype=jnp.bfloat16))
    ref_bf16 = reference_forward(user_id, item_id, params, emb_dtype=jnp.bfloat16)
    assert out_bf16.shape == (batch, 1), out_bf16.shape
    assert jnp.allclose(out_bf16, ref_bf16, atol=2e-5, rtol=1e-4)

    # Full f32 path: exact fidelity check against the PyTorch-equivalent math.
    out_f32 = jax.block_until_ready(
        fwd(user_id, item_id, params, batch_tile=batch_tile, emb_dtype=jnp.float32))
    ref_f32 = reference_forward(user_id, item_id, params, emb_dtype=jnp.float32)
    assert jnp.allclose(out_f32, ref_f32, atol=2e-5, rtol=1e-4)

    print("KERNEL_OK")
</pallas_src>

<mosaic_0001>
module attributes {stable_mosaic.version = 11 : i64} {
  func.func @kernel(%arg0: i32, %arg1: memref<256x32xbf16, #tpu.memory_space<vmem>>, %arg2: memref<256x32xbf16, #tpu.memory_space<vmem>>, %arg3: memref<32x32xf32, #tpu.memory_space<vmem>>, %arg4: memref<32x32xf32, #tpu.memory_space<vmem>>, %arg5: memref<32x1xf32, #tpu.memory_space<vmem>>, %arg6: memref<32x32xf32, #tpu.memory_space<vmem>>, %arg7: memref<32x1xf32, #tpu.memory_space<vmem>>, %arg8: memref<1x32xf32, #tpu.memory_space<vmem>>, %arg9: memref<32x1xf32, #tpu.memory_space<vmem>>, %arg10: memref<1x256xf32, #tpu.memory_space<vmem>>) attributes {dimension_semantics = [#tpu.dimension_semantics<parallel>], iteration_bounds = array<i64: 4>, scalar_prefetch = 0 : i64, scratch_operands = 0 : i64, tpu.core_type = #tpu.core_type<tc>, window_params = [{transform_indices = @transform_0, window_bounds = array<i64: 256, 32>}, {transform_indices = @transform_1, window_bounds = array<i64: 256, 32>}, {pipeline_mode = #tpu.pipeline_mode<synchronous>, transform_indices = @transform_2, window_bounds = array<i64: 32, 32>}, {pipeline_mode = #tpu.pipeline_mode<synchronous>, transform_indices = @transform_3, window_bounds = array<i64: 32, 32>}, {pipeline_mode = #tpu.pipeline_mode<synchronous>, transform_indices = @transform_4, window_bounds = array<i64: 32, 1>}, {pipeline_mode = #tpu.pipeline_mode<synchronous>, transform_indices = @transform_5, window_bounds = array<i64: 32, 32>}, {pipeline_mode = #tpu.pipeline_mode<synchronous>, transform_indices = @transform_6, window_bounds = array<i64: 32, 1>}, {pipeline_mode = #tpu.pipeline_mode<synchronous>, transform_indices = @transform_7, window_bounds = array<i64: 1, 32>}, {pipeline_mode = #tpu.pipeline_mode<synchronous>, transform_indices = @transform_8, window_bounds = array<i64: 32, 1>}, {transform_indices = @transform_9, window_bounds = array<i64: 1, 256>}]} {
    %c0 = arith.constant 0 : index
    %c0_0 = arith.constant 0 : index
    %0 = vector.load %arg1[%c0, %c0_0] : memref<256x32xbf16, #tpu.memory_space<vmem>>, vector<256x32xbf16>
    %1 = arith.extf %0 : vector<256x32xbf16> to vector<256x32xf32>
    %c0_1 = arith.constant 0 : index
    %c0_2 = arith.constant 0 : index
    %2 = vector.load %arg2[%c0_1, %c0_2] : memref<256x32xbf16, #tpu.memory_space<vmem>>, vector<256x32xbf16>
    %3 = arith.extf %2 : vector<256x32xbf16> to vector<256x32xf32>
    %4 = arith.mulf %1, %3 : vector<256x32xf32>
    %c0_3 = arith.constant 0 : index
    %c0_4 = arith.constant 0 : index
    %5 = vector.load %arg8[%c0_3, %c0_4] : memref<1x32xf32, #tpu.memory_space<vmem>>, vector<1x32xf32>
    %cst = arith.constant dense<0.000000e+00> : vector<1x256xf32>
    %6 = tpu.matmul %5, %4, %cst {dimension_numbers = #tpu.dot_dimension_numbers<[1], [1], [0], [0], [0, 0, 1, 0], [], []>} : vector<1x32xf32>, vector<256x32xf32>, vector<1x256xf32> -> vector<1x256xf32>
    %c0_5 = arith.constant 0 : index
    %c0_6 = arith.constant 0 : index
    %7 = vector.load %arg3[%c0_5, %c0_6] : memref<32x32xf32, #tpu.memory_space<vmem>>, vector<32x32xf32>
    %cst_7 = arith.constant dense<0.000000e+00> : vector<32x256xf32>
    %8 = tpu.matmul %7, %1, %cst_7 {dimension_numbers = #tpu.dot_dimension_numbers<[1], [1], [0], [0], [0, 0, 1, 0], [], []>} : vector<32x32xf32>, vector<256x32xf32>, vector<32x256xf32> -> vector<32x256xf32>
    %c0_8 = arith.constant 0 : index
    %c0_9 = arith.constant 0 : index
    %9 = vector.load %arg4[%c0_8, %c0_9] : memref<32x32xf32, #tpu.memory_space<vmem>>, vector<32x32xf32>
    %cst_10 = arith.constant dense<0.000000e+00> : vector<32x256xf32>
    %10 = tpu.matmul %9, %3, %cst_10 {dimension_numbers = #tpu.dot_dimension_numbers<[1], [1], [0], [0], [0, 0, 1, 0], [], []>} : vector<32x32xf32>, vector<256x32xf32>, vector<32x256xf32> -> vector<32x256xf32>
    %11 = arith.addf %8, %10 : vector<32x256xf32>
    %c0_11 = arith.constant 0 : index
    %c0_12 = arith.constant 0 : index
    %12 = vector.load %arg5[%c0_11, %c0_12] : memref<32x1xf32, #tpu.memory_space<vmem>>, vector<32x1xf32>
    %13 = vector.broadcast %12 : vector<32x1xf32> to vector<32x256xf32>
    %14 = arith.addf %11, %13 : vector<32x256xf32>
    %cst_13 = arith.constant 0.000000e+00 : f32
    %15 = vector.broadcast %cst_13 : f32 to vector<32x256xf32>
    %16 = arith.maximumf %14, %15 : vector<32x256xf32>
    %c0_14 = arith.constant 0 : index
    %c0_15 = arith.constant 0 : index
    %17 = vector.load %arg6[%c0_14, %c0_15] : memref<32x32xf32, #tpu.memory_space<vmem>>, vector<32x32xf32>
    %c0_16 = arith.constant 0 : index
    %c0_17 = arith.constant 0 : index
    %18 = vector.load %arg7[%c0_16, %c0_17] : memref<32x1xf32, #tpu.memory_space<vmem>>, vector<32x1xf32>
    %cst_18 = arith.constant dense<0.000000e+00> : vector<32x256xf32>
    %19 = tpu.matmul %17, %16, %cst_18 {dimension_numbers = #tpu.dot_dimension_numbers<[1], [0], [0], [1], [0, 0, 1, 1], [], []>} : vector<32x32xf32>, vector<32x256xf32>, vector<32x256xf32> -> vector<32x256xf32>
    %20 = vector.broadcast %18 : vector<32x1xf32> to vector<32x256xf32>
    %21 = arith.addf %19, %20 : vector<32x256xf32>
    %cst_19 = arith.constant 0.000000e+00 : f32
    %22 = vector.broadcast %cst_19 : f32 to vector<32x256xf32>
    %23 = arith.maximumf %21, %22 : vector<32x256xf32>
    %c0_20 = arith.constant 0 : index
    %c0_21 = arith.constant 0 : index
    %24 = vector.load %arg9[%c0_20, %c0_21] : memref<32x1xf32, #tpu.memory_space<vmem>>, vector<32x1xf32>
    %25 = vector.broadcast %24 : vector<32x1xf32> to vector<32x256xf32>
    %26 = arith.mulf %23, %25 : vector<32x256xf32>
    %cst_22 = arith.constant dense<0.000000e+00> : vector<256xf32>
    %27 = vector.multi_reduction <add>, %26, %cst_22 [0] : vector<32x256xf32> to vector<256xf32>
    %28 = vector.shape_cast %27 : vector<256xf32> to vector<1x256xf32>
    %29 = arith.addf %6, %28 : vector<1x256xf32>
    %c0_23 = arith.constant 0 : index
    %c0_24 = arith.constant 0 : index
    %30 = vector.load %arg10[%c0_23, %c0_24] : memref<1x256xf32, #tpu.memory_space<vmem>>, vector<1x256xf32>
    tpu.vector_store %arg10[%c0_23, %c0_24], %29 {strides = array<i32>} : memref<1x256xf32, #tpu.memory_space<vmem>>, vector<1x256xf32>,
    return
  }
  func.func @transform_0(%arg0: i32) -> (i32, i32) {
    %c0_i32 = arith.constant 0 : i32
    %c0_i32_0 = arith.constant 0 : i32
    return %arg0, %c0_i32 : i32, i32
  }
  func.func @transform_1(%arg0: i32) -> (i32, i32) {
    %c0_i32 = arith.constant 0 : i32
    %c0_i32_0 = arith.constant 0 : i32
    return %arg0, %c0_i32 : i32, i32
  }
  func.func @transform_2(%arg0: i32) -> (i32, i32) {
    %c0_i32 = arith.constant 0 : i32
    %c0_i32_0 = arith.constant 0 : i32
    %c0_i32_1 = arith.constant 0 : i32
    return %c0_i32, %c0_i32_0 : i32, i32
  }
  func.func @transform_3(%arg0: i32) -> (i32, i32) {
    %c0_i32 = arith.constant 0 : i32
    %c0_i32_0 = arith.constant 0 : i32
    %c0_i32_1 = arith.constant 0 : i32
    return %c0_i32, %c0_i32_0 : i32, i32
  }
  func.func @transform_4(%arg0: i32) -> (i32, i32) {
    %c0_i32 = arith.constant 0 : i32
    %c0_i32_0 = arith.constant 0 : i32
    %c0_i32_1 = arith.constant 0 : i32
    return %c0_i32, %c0_i32_0 : i32, i32
  }
  func.func @transform_5(%arg0: i32) -> (i32, i32) {
    %c0_i32 = arith.constant 0 : i32
    %c0_i32_0 = arith.constant 0 : i32
    %c0_i32_1 = arith.constant 0 : i32
    return %c0_i32, %c0_i32_0 : i32, i32
  }
  func.func @transform_6(%arg0: i32) -> (i32, i32) {
    %c0_i32 = arith.constant 0 : i32
    %c0_i32_0 = arith.constant 0 : i32
    %c0_i32_1 = arith.constant 0 : i32
    return %c0_i32, %c0_i32_0 : i32, i32
  }
  func.func @transform_7(%arg0: i32) -> (i32, i32) {
    %c0_i32 = arith.constant 0 : i32
    %c0_i32_0 = arith.constant 0 : i32
    %c0_i32_1 = arith.constant 0 : i32
    return %c0_i32, %c0_i32_0 : i32, i32
  }
  func.func @transform_8(%arg0: i32) -> (i32, i32) {
    %c0_i32 = arith.constant 0 : i32
    %c0_i32_0 = arith.constant 0 : i32
    %c0_i32_1 = arith.constant 0 : i32
    return %c0_i32, %c0_i32_0 : i32, i32
  }
  func.func @transform_9(%arg0: i32) -> (i32, i32) {
    %c0_i32 = arith.constant 0 : i32
    %c0_i32_0 = arith.constant 0 : i32
    return %c0_i32, %arg0 : i32, i32
  }
}

</mosaic_0001>

<llo_original>
// kernel: neumf_forward.1
$region0: #{neumf_forward.1}
  #allocation0 [shape = 'u32[]', space=smem, size = 0x4, offset = 0x4, fixed_abs, tag = 'smem constant byte address 0x4 - core index']
  #allocation1 [shape = 'u32[144,128]{1,0:T(1,128)}', space=vmem, size = 0x12000, scoped, tag = 'internal scratch']
  %s0 = inlined_call_operand.vmem [shape: bf16[1024,32], index: 0, kind: input, shape index: {}]
  %s1 = inlined_call_operand.vmem [shape: bf16[1024,32], index: 1, kind: input, shape index: {}]
  %s2 = inlined_call_operand.vmem [shape: f32[32,32], index: 2, kind: input, shape index: {}]
  %s3 = inlined_call_operand.vmem [shape: f32[32,32], index: 3, kind: input, shape index: {}]
  %s4 = inlined_call_operand.vmem [shape: f32[32,1], index: 4, kind: input, shape index: {}]
  %s5 = inlined_call_operand.vmem [shape: f32[32,32], index: 5, kind: input, shape index: {}]
  %s6 = inlined_call_operand.vmem [shape: f32[32,1], index: 6, kind: input, shape index: {}]
  %s7 = inlined_call_operand.vmem [shape: f32[1,32], index: 7, kind: input, shape index: {}]
  %s8 = inlined_call_operand.vmem [shape: f32[32,1], index: 8, kind: input, shape index: {}]
  %s9 = inlined_call_operand.vmem [shape: f32[1,1024], index: 9, kind: output, shape index: {}]
  %s10 = sld [smem:[#allocation0]]
  $region69: #{neumf_forward.1} parent=0
    _
  %s12 = ssub.s32 1, %s10
  %s13 = scalar_select 0, %s12, %s10
  loop: start=0, step=1, limit=6
  $region2: #{neumf_forward.1} parent=0 // loop_pre_header
    _
  $region3: #{neumf_forward.1} parent=0 // loop_header
    %s15 = sphi 0, %s19
    %p16 = scmp.ge.s32.totalorder %s15, 6
    %s25 = sphi 0, %s27
    %s28 = sphi 0, %s25
    %s29 = sphi 0, %s28
    %s45 = sphi 0, %s29
    %s51 = sphi 0, %s53
    %s54 = sphi 0, %s51
    %s55 = sphi 0, %s54
    %s71 = sphi 0, %s55
    %s75 = sphi 0, %s75
    %s77 = sphi 0, %s75
    %s78 = sphi 0, %s77
    %s92 = sphi 0, %s78
    %s96 = sphi 0, %s96
    %s98 = sphi 0, %s96
    %s99 = sphi 0, %s98
    %s113 = sphi 0, %s99
    %s117 = sphi 0, %s117
    %s119 = sphi 0, %s117
    %s120 = sphi 0, %s119
    %s134 = sphi 0, %s120
    %s138 = sphi 0, %s138
    %s140 = sphi 0, %s138
    %s141 = sphi 0, %s140
    %s155 = sphi 0, %s141
    %s159 = sphi 0, %s159
    %s161 = sphi 0, %s159
    %s162 = sphi 0, %s161
    %s176 = sphi 0, %s162
    %s180 = sphi 0, %s180
    %s182 = sphi 0, %s180
    %s183 = sphi 0, %s182
    %s197 = sphi 0, %s183
    %s201 = sphi 0, %s201
    %s203 = sphi 0, %s201
    %s204 = sphi 0, %s203
    %s218 = sphi 0, %s204
    %s224 = sphi 0, %s226
    %s227 = sphi 0, %s224
    %s228 = sphi 0, %s227
    %s244 = sphi 0, %s228
  $region4: #{neumf_forward.1} parent=0 // loop_header_branch
    %18 = sbr.rel (%p16) target = $region8
  $region5: #{neumf_forward.1} parent=0 // loop_body
    %s20 = ssub.s32 %s15, 1
    %s21 = ssub.s32 %s15, 2
    %s22 = sadd.s32 %s15, 1
    %s23 = ssub.s32 %s15, %s22
    %p24 = scmp.eq.s32.totalorder %s23, 0
    %s26 = sadd.s32 %s25, 1
    %s27 = scalar_select %p24, %s25, %s26
    %p30 = pneg %p24
    %p31 = scmp.eq.s32.totalorder %s15, 3
    %p32 = por %p30, %p31
    %p33 = scmp.ne.s32.totalorder %s25, %s28
    %p34 = scmp.eq.s32.totalorder %s15, 0
    %p35 = por %p33, %p34
    %p36 = scmp.ne.s32.totalorder %s25, %s28
    %p37 = scmp.eq.s32.totalorder %s20, 3
    %p38 = por %p36, %p37
    %p39 = scmp.ne.s32.totalorder %s28, %s29
    %p40 = scmp.eq.s32.totalorder %s20, 0
    %p41 = por %p39, %p40
    %p42 = scmp.ne.s32.totalorder %s28, %s29
    %p43 = scmp.eq.s32.totalorder %s21, 3
    %p44 = por %p42, %p43
    %p46 = scmp.ne.s32.totalorder %s29, %s45
    %p47 = scmp.eq.s32.totalorder %s21, 0
    %p48 = por %p46, %p47
    %s49 = ssub.s32 %s15, %s22
    %p50 = scmp.eq.s32.totalorder %s49, 0
    %s52 = sadd.s32 %s51, 1
    %s53 = scalar_select %p50, %s51, %s52
    %p56 = pneg %p50
    %p57 = scmp.eq.s32.totalorder %s15, 3
    %p58 = por %p56, %p57
    %p59 = scmp.ne.s32.totalorder %s51, %s54
    %p60 = scmp.eq.s32.totalorder %s15, 0
    %p61 = por %p59, %p60
    %p62 = scmp.ne.s32.totalorder %s51, %s54
    %p63 = scmp.eq.s32.totalorder %s20, 3
    %p64 = por %p62, %p63
    %p65 = scmp.ne.s32.totalorder %s54, %s55
    %p66 = scmp.eq.s32.totalorder %s20, 0
    %p67 = por %p65, %p66
    %p68 = scmp.ne.s32.totalorder %s54, %s55
    %p69 = scmp.eq.s32.totalorder %s21, 3
    %p70 = por %p68, %p69
    %p72 = scmp.ne.s32.totalorder %s55, %s71
    %p73 = scmp.eq.s32.totalorder %s21, 0
    %p74 = por %p72, %p73
    %s76 = sadd.s32 %s75, 1
    %p79 = scmp.eq.s32.totalorder %s15, 3
    %p80 = scmp.ne.s32.totalorder %s75, %s77
    %p81 = scmp.eq.s32.totalorder %s15, 0
    %p82 = por %p80, %p81
    %p83 = scmp.ne.s32.totalorder %s75, %s77
    %p84 = scmp.eq.s32.totalorder %s20, 3
    %p85 = por %p83, %p84
    %p86 = scmp.ne.s32.totalorder %s77, %s78
    %p87 = scmp.eq.s32.totalorder %s20, 0
    %p88 = por %p86, %p87
    %p89 = scmp.ne.s32.totalorder %s77, %s78
    %p90 = scmp.eq.s32.totalorder %s21, 3
    %p91 = por %p89, %p90
    %p93 = scmp.ne.s32.totalorder %s78, %s92
    %p94 = scmp.eq.s32.totalorder %s21, 0
    %p95 = por %p93, %p94
    %s97 = sadd.s32 %s96, 1
    %p100 = scmp.eq.s32.totalorder %s15, 3
    %p101 = scmp.ne.s32.totalorder %s96, %s98
    %p102 = scmp.eq.s32.totalorder %s15, 0
    %p103 = por %p101, %p102
    %p104 = scmp.ne.s32.totalorder %s96, %s98
    %p105 = scmp.eq.s32.totalorder %s20, 3
    %p106 = por %p104, %p105
    %p107 = scmp.ne.s32.totalorder %s98, %s99
    %p108 = scmp.eq.s32.totalorder %s20, 0
    %p109 = por %p107, %p108
    %p110 = scmp.ne.s32.totalorder %s98, %s99
    %p111 = scmp.eq.s32.totalorder %s21, 3
    %p112 = por %p110, %p111
    %p114 = scmp.ne.s32.totalorder %s99, %s113
    %p115 = scmp.eq.s32.totalorder %s21, 0
    %p116 = por %p114, %p115
    %s118 = sadd.s32 %s117, 1
    %p121 = scmp.eq.s32.totalorder %s15, 3
    %p122 = scmp.ne.s32.totalorder %s117, %s119
    %p123 = scmp.eq.s32.totalorder %s15, 0
    %p124 = por %p122, %p123
    %p125 = scmp.ne.s32.totalorder %s117, %s119
    %p126 = scmp.eq.s32.totalorder %s20, 3
    %p127 = por %p125, %p126
    %p128 = scmp.ne.s32.totalorder %s119, %s120
    %p129 = scmp.eq.s32.totalorder %s20, 0
    %p130 = por %p128, %p129
    %p131 = scmp.ne.s32.totalorder %s119, %s120
    %p132 = scmp.eq.s32.totalorder %s21, 3
    %p133 = por %p131, %p132
    %p135 = scmp.ne.s32.totalorder %s120, %s134
    %p136 = scmp.eq.s32.totalorder %s21, 0
    %p137 = por %p135, %p136
    %s139 = sadd.s32 %s138, 1
    %p142 = scmp.eq.s32.totalorder %s15, 3
    %p143 = scmp.ne.s32.totalorder %s138, %s140
    %p144 = scmp.eq.s32.totalorder %s15, 0
    %p145 = por %p143, %p144
    %p146 = scmp.ne.s32.totalorder %s138, %s140
    %p147 = scmp.eq.s32.totalorder %s20, 3
    %p148 = por %p146, %p147
    %p149 = scmp.ne.s32.totalorder %s140, %s141
    %p150 = scmp.eq.s32.totalorder %s20, 0
    %p151 = por %p149, %p150
    %p152 = scmp.ne.s32.totalorder %s140, %s141
    %p153 = scmp.eq.s32.totalorder %s21, 3
    %p154 = por %p152, %p153
    %p156 = scmp.ne.s32.totalorder %s141, %s155
    %p157 = scmp.eq.s32.totalorder %s21, 0
    %p158 = por %p156, %p157
    %s160 = sadd.s32 %s159, 1
    %p163 = scmp.eq.s32.totalorder %s15, 3
    %p164 = scmp.ne.s32.totalorder %s159, %s161
    %p165 = scmp.eq.s32.totalorder %s15, 0
    %p166 = por %p164, %p165
    %p167 = scmp.ne.s32.totalorder %s159, %s161
    %p168 = scmp.eq.s32.totalorder %s20, 3
    %p169 = por %p167, %p168
    %p170 = scmp.ne.s32.totalorder %s161, %s162
    %p171 = scmp.eq.s32.totalorder %s20, 0
    %p172 = por %p170, %p171
    %p173 = scmp.ne.s32.totalorder %s161, %s162
    %p174 = scmp.eq.s32.totalorder %s21, 3
    %p175 = por %p173, %p174
    %p177 = scmp.ne.s32.totalorder %s162, %s176
    %p178 = scmp.eq.s32.totalorder %s21, 0
    %p179 = por %p177, %p178
    %s181 = sadd.s32 %s180, 1
    %p184 = scmp.eq.s32.totalorder %s15, 3
    %p185 = scmp.ne.s32.totalorder %s180, %s182
    %p186 = scmp.eq.s32.totalorder %s15, 0
    %p187 = por %p185, %p186
    %p188 = scmp.ne.s32.totalorder %s180, %s182
    %p189 = scmp.eq.s32.totalorder %s20, 3
    %p190 = por %p188, %p189
    %p191 = scmp.ne.s32.totalorder %s182, %s183
    %p192 = scmp.eq.s32.totalorder %s20, 0
    %p193 = por %p191, %p192
    %p194 = scmp.ne.s32.totalorder %s182, %s183
    %p195 = scmp.eq.s32.totalorder %s21, 3
    %p196 = por %p194, %p195
    %p198 = scmp.ne.s32.totalorder %s183, %s197
    %p199 = scmp.eq.s32.totalorder %s21, 0
    %p200 = por %p198, %p199
    %s202 = sadd.s32 %s201, 1
    %p205 = scmp.eq.s32.totalorder %s15, 3
    %p206 = scmp.ne.s32.totalorder %s201, %s203
    %p207 = scmp.eq.s32.totalorder %s15, 0
    %p208 = por %p206, %p207
    %p209 = scmp.ne.s32.totalorder %s201, %s203
    %p210 = scmp.eq.s32.totalorder %s20, 3
    %p211 = por %p209, %p210
    %p212 = scmp.ne.s32.totalorder %s203, %s204
    %p213 = scmp.eq.s32.totalorder %s20, 0
    %p214 = por %p212, %p213
    %p215 = scmp.ne.s32.totalorder %s203, %s204
    %p216 = scmp.eq.s32.totalorder %s21, 3
    %p217 = por %p215, %p216
    %p219 = scmp.ne.s32.totalorder %s204, %s218
    %p220 = scmp.eq.s32.totalorder %s21, 0
    %p221 = por %p219, %p220
    %s222 = ssub.s32 %s15, %s22
    %p223 = scmp.eq.s32.totalorder %s222, 0
    %s225 = sadd.s32 %s224, 1
    %s226 = scalar_select %p223, %s224, %s225
    %p229 = pneg %p223
    %p230 = scmp.eq.s32.totalorder %s15, 3
    %p231 = por %p229, %p230
    %p232 = scmp.ne.s32.totalorder %s224, %s227
    %p233 = scmp.eq.s32.totalorder %s15, 0
    %p234 = por %p232, %p233
    %p235 = scmp.ne.s32.totalorder %s224, %s227
    %p236 = scmp.eq.s32.totalorder %s20, 3
    %p237 = por %p235, %p236
    %p238 = scmp.ne.s32.totalorder %s227, %s228
    %p239 = scmp.eq.s32.totalorder %s20, 0
    %p240 = por %p238, %p239
    %p241 = scmp.ne.s32.totalorder %s227, %s228
    %p242 = scmp.eq.s32.totalorder %s21, 3
    %p243 = por %p241, %p242
    %p245 = scmp.ne.s32.totalorder %s228, %s244
    %p246 = scmp.eq.s32.totalorder %s21, 0
    %p247 = por %p245, %p246
    %p248 = scmp.le.s32.totalorder 1, %s15
    %p249 = scmp.lt.s32.totalorder %s15, 5
    %p250 = pnand %p248, %p249
    %p251 = pneg %p250
    // Predicated region
    $region9: #{neumf_forward.1} parent=5 // pred_check
      _
    $region10: #{neumf_forward.1} parent=5 // pred_check_branch
      %253 = sbr.rel (%p250) target = $region12
    $region11: #{neumf_forward.1} parent=5 // pred_region
      %s254 = ssub.s32 %s15, 1
      // Predicated region
      $region13: #{neumf_forward.1} parent=11 // pred_check
        %p255 = pneg %p88
      $region14: #{neumf_forward.1} parent=11 // pred_check_branch
        %257 = sbr.rel (%p255) target = $region16
      $region15: #{neumf_forward.1} parent=11 // pred_region
        _
      $region16: #{neumf_forward.1} parent=11 // pred_fallthru
        _
      // Predicated region
      $region17: #{neumf_forward.1} parent=11 // pred_check
        %p258 = pneg %p109
      $region18: #{neumf_forward.1} parent=11 // pred_check_branch
        %260 = sbr.rel (%p258) target = $region20
      $region19: #{neumf_forward.1} parent=11 // pred_region
        _
      $region20: #{neumf_forward.1} parent=11 // pred_fallthru
        _
      // Predicated region
      $region21: #{neumf_forward.1} parent=11 // pred_check
        %p261 = pneg %p130
      $region22: #{neumf_forward.1} parent=11 // pred_check_branch
        %263 = sbr.rel (%p261) target = $region24
      $region23: #{neumf_forward.1} parent=11 // pred_region
        _
      $region24: #{neumf_forward.1} parent=11 // pred_fallthru
        _
      // Predicated region
      $region25: #{neumf_forward.1} parent=11 // pred_check
        %p264 = pneg %p151
      $region26: #{neumf_forward.1} parent=11 // pred_check_branch
        %266 = sbr.rel (%p264) target = $region28
      $region27: #{neumf_forward.1} parent=11 // pred_region
        _
      $region28: #{neumf_forward.1} parent=11 // pred_fallthru
        _
      // Predicated region
      $region29: #{neumf_forward.1} parent=11 // pred_check
        %p267 = pneg %p172
      $region30: #{neumf_forward.1} parent=11 // pred_check_branch
        %269 = sbr.rel (%p267) target = $region32
      $region31: #{neumf_forward.1} parent=11 // pred_region
        _
      $region32: #{neumf_forward.1} parent=11 // pred_fallthru
        _
      // Predicated region
      $region33: #{neumf_forward.1} parent=11 // pred_check
        %p270 = pneg %p193
      $region34: #{neumf_forward.1} parent=11 // pred_check_branch
        %272 = sbr.rel (%p270) target = $region36
      $region35: #{neumf_forward.1} parent=11 // pred_region
        _
      $region36: #{neumf_forward.1} parent=11 // pred_fallthru
        _
      // Predicated region
      $region37: #{neumf_forward.1} parent=11 // pred_check
        %p273 = pneg %p214
      $region38: #{neumf_forward.1} parent=11 // pred_check_branch
        %275 = sbr.rel (%p273) target = $region40
      $region39: #{neumf_forward.1} parent=11 // pred_region
        _
      $region40: #{neumf_forward.1} parent=11 // pred_fallthru
        _
    $region12: #{neumf_forward.1} parent=5 // pred_fallthru
      _
    %p276 = scmp.lt.s32.totalorder %s15, 4
    // Predicated region
    $region41: #{neumf_forward.1} parent=5 // pred_check
      %p277 = pneg %p276
    $region42: #{neumf_forward.1} parent=5 // pred_check_branch
      %279 = sbr.rel (%p277) target = $region44
    $region43: #{neumf_forward.1} parent=5 // pred_region
      // Predicated region
      $region45: #{neumf_forward.1} parent=43 // pred_check
        %p280 = pneg %p35
      $region46: #{neumf_forward.1} parent=43 // pred_check_branch
        %282 = sbr.rel (%p280) target = $region48
      $region47: #{neumf_forward.1} parent=43 // pred_region
        %s283 = smul.u32 32, %s15
        %p284 = scmp.lt.s32.totalorder %s283, 127
        %s285 = scalar_select %p284, %s283, 127
        %s286 = smul.addr %s285, 4
        %s287 = scalar_lea.vmem %s0, %s286
        %s288 = smul.u32 32, %s15
      $region48: #{neumf_forward.1} parent=43 // pred_fallthru
        _
      // Predicated region
      $region49: #{neumf_forward.1} parent=43 // pred_check
        %p289 = pneg %p61
      $region50: #{neumf_forward.1} parent=43 // pred_check_branch
        %291 = sbr.rel (%p289) target = $region52
      $region51: #{neumf_forward.1} parent=43 // pred_region
        %s292 = smul.u32 32, %s15
        %p293 = scmp.lt.s32.totalorder %s292, 127
        %s294 = scalar_select %p293, %s292, 127
        %s295 = smul.addr %s294, 4
        %s296 = scalar_lea.vmem %s1, %s295
        %s297 = smul.u32 32, %s15
      $region52: #{neumf_forward.1} parent=43 // pred_fallthru
        _
    $region44: #{neumf_forward.1} parent=5 // pred_fallthru
      _
    %p298 = scmp.le.s32.totalorder 1, %s15
    %p299 = scmp.lt.s32.totalorder %s15, 5
    %p300 = pnand %p298, %p299
    %p301 = pneg %p300
    // Predicated region
    $region53: #{neumf_forward.1} parent=5 // pred_check
      _
    $region54: #{neumf_forward.1} parent=5 // pred_check_branch
      %303 = sbr.rel (%p300) target = $region56
    $region55: #{neumf_forward.1} parent=5 // pred_region
      %s304 = ssub.s32 %s15, 1
      %s305 = smul.u32 32, %s20
      %p306 = scmp.lt.s32.totalorder %s305, 127
      %s307 = scalar_select %p306, %s305, 127
      %s308 = smul.addr %s307, 4
      %s309 = scalar_lea.vmem %s0, %s308
      %p310 = pneg %p41
      %p311 = pneg %p38
      %s312 = smul.u32 32, %s20
      %p313 = scmp.lt.s32.totalorder %s312, 127
      %s314 = scalar_select %p313, %s312, 127
      %s315 = smul.addr %s314, 4
      %s316 = scalar_lea.vmem %s1, %s315
      %p317 = pneg %p67
      %p318 = pneg %p64
      %p319 = pneg %p88
      %p320 = pneg %p85
      %p321 = pneg %p109
      %p322 = pneg %p106
      %p323 = pneg %p130
      %p324 = pneg %p127
      %p325 = pneg %p151
      %p326 = pneg %p148
      %p327 = pneg %p172
      %p328 = pneg %p169
      %p329 = pneg %p193
      %p330 = pneg %p190
      %p331 = pneg %p214
      %p332 = pneg %p211
      %p333 = pneg %p240
      %p334 = pneg %p237
      %s335 = smul.u32 2, %s20
      %p336 = scmp.lt.s32.totalorder %s335, 7
      %s337 = scalar_select %p336, %s335, 7
      %s338 = scalar_lea.vmem %s9, %s337
      %s339 = smul.u32 32, %s20
      %p340 = scmp.lt.s32.totalorder %s339, 127
      %s341 = scalar_select %p340, %s339, 127
      %s342 = smul.addr %s341, 4
      %s343 = scalar_lea.vmem %s0, %s342
      %s344 = smul.u32 32, %s20
      %s345 = smul.u32 32, %s20
      %p346 = scmp.lt.s32.totalorder %s345, 127
      %s347 = scalar_select %p346, %s345, 127
      %s348 = smul.addr %s347, 4
      %s349 = scalar_lea.vmem %s1, %s348
      %s350 = smul.u32 32, %s20
      %s351 = smul.u32 2, %s20
      %p352 = scmp.lt.s32.totalorder %s351, 7
      %s353 = scalar_select %p352, %s351, 7
      %s354 = scalar_lea.vmem %s9, %s353
      %s355 = smul.u32 2, %s20
      %v356 = vld [vmem:[%s343] sm:$0xf]
      %v357 = vld [vmem:[%s343 + $0x4] sm:$0xf]
      %v358 = vld [vmem:[%s343 + $0x8] sm:$0xf]
      %v359 = vld [vmem:[%s343 + $0xc] sm:$0xf]
      %v360 = vld [vmem:[%s343 + $0x10] sm:$0xf]
      %v361 = vld [vmem:[%s343 + $0x14] sm:$0xf]
      %v362 = vld [vmem:[%s343 + $0x18] sm:$0xf]
      %v363 = vld [vmem:[%s343 + $0x1c] sm:$0xf]
      %v364 = vld [vmem:[%s343 + $0x20] sm:$0xf]
      %v365 = vld [vmem:[%s343 + $0x24] sm:$0xf]
      %v366 = vld [vmem:[%s343 + $0x28] sm:$0xf]
      %v367 = vld [vmem:[%s343 + $0x2c] sm:$0xf]
      %v368 = vld [vmem:[%s343 + $0x30] sm:$0xf]
      %v369 = vld [vmem:[%s343 + $0x34] sm:$0xf]
      %v370 = vld [vmem:[%s343 + $0x38] sm:$0xf]
      %v371 = vld [vmem:[%s343 + $0x3c] sm:$0xf]
      %v372 = vld [vmem:[%s343 + $0x40] sm:$0xf]
      %v373 = vld [vmem:[%s343 + $0x44] sm:$0xf]
      %v374 = vld [vmem:[%s343 + $0x48] sm:$0xf]
      %v375 = vld [vmem:[%s343 + $0x4c] sm:$0xf]
      %v376 = vld [vmem:[%s343 + $0x50] sm:$0xf]
      %v377 = vld [vmem:[%s343 + $0x54] sm:$0xf]
      %v378 = vld [vmem:[%s343 + $0x58] sm:$0xf]
      %v379 = vld [vmem:[%s343 + $0x5c] sm:$0xf]
      %v380 = vld [vmem:[%s343 + $0x60] sm:$0xf]
      %v381 = vld [vmem:[%s343 + $0x64] sm:$0xf]
      %v382 = vld [vmem:[%s343 + $0x68] sm:$0xf]
      %v383 = vld [vmem:[%s343 + $0x6c] sm:$0xf]
      %v384 = vld [vmem:[%s343 + $0x70] sm:$0xf]
      %v385 = vld [vmem:[%s343 + $0x74] sm:$0xf]
      %v386 = vld [vmem:[%s343 + $0x78] sm:$0xf]
      %v387 = vld [vmem:[%s343 + $0x7c] sm:$0xf]
      %v388 = vunpack.c.l.bf16 %v356
      %v389 = vunpack.c.l.bf16 %v357
      %v390 = vunpack.c.l.bf16 %v358
      %v391 = vunpack.c.l.bf16 %v359
      %v392 = vunpack.c.l.bf16 %v360
      %v393 = vunpack.c.l.bf16 %v361
      %v394 = vunpack.c.l.bf16 %v362
      %v395 = vunpack.c.l.bf16 %v363
      %v396 = vunpack.c.l.bf16 %v364
      %v397 = vunpack.c.l.bf16 %v365
      %v398 = vunpack.c.l.bf16 %v366
      %v399 = vunpack.c.l.bf16 %v367
      %v400 = vunpack.c.l.bf16 %v368
      %v401 = vunpack.c.l.bf16 %v369
      %v402 = vunpack.c.l.bf16 %v370
      %v403 = vunpack.c.l.bf16 %v371
      %v404 = vunpack.c.l.bf16 %v372
      %v405 = vunpack.c.l.bf16 %v373
      %v406 = vunpack.c.l.bf16 %v374
      %v407 = vunpack.c.l.bf16 %v375
      %v408 = vunpack.c.l.bf16 %v376
      %v409 = vunpack.c.l.bf16 %v377
      %v410 = vunpack.c.l.bf16 %v378
      %v411 = vunpack.c.l.bf16 %v379
      %v412 = vunpack.c.l.bf16 %v380
      %v413 = vunpack.c.l.bf16 %v381
      %v414 = vunpack.c.l.bf16 %v382
      %v415 = vunpack.c.l.bf16 %v383
      %v416 = vunpack.c.l.bf16 %v384
      %v417 = vunpack.c.l.bf16 %v385
      %v418 = vunpack.c.l.bf16 %v386
      %v419 = vunpack.c.l.bf16 %v387
      %v420 = vld [vmem:[%s349] sm:$0xf]
      %v421 = vld [vmem:[%s349 + $0x4] sm:$0xf]
      %v422 = vld [vmem:[%s349 + $0x8] sm:$0xf]
      %v423 = vld [vmem:[%s349 + $0xc] sm:$0xf]
      %v424 = vld [vmem:[%s349 + $0x10] sm:$0xf]
      %v425 = vld [vmem:[%s349 + $0x14] sm:$0xf]
      %v426 = vld [vmem:[%s349 + $0x18] sm:$0xf]
      %v427 = vld [vmem:[%s349 + $0x1c] sm:$0xf]
      %v428 = vld [vmem:[%s349 + $0x20] sm:$0xf]
      %v429 = vld [vmem:[%s349 + $0x24] sm:$0xf]
      %v430 = vld [vmem:[%s349 + $0x28] sm:$0xf]
      %v431 = vld [vmem:[%s349 + $0x2c] sm:$0xf]
      %v432 = vld [vmem:[%s349 + $0x30] sm:$0xf]
      %v433 = vld [vmem:[%s349 + $0x34] sm:$0xf]
      %v434 = vld [vmem:[%s349 + $0x38] sm:$0xf]
      %v435 = vld [vmem:[%s349 + $0x3c] sm:$0xf]
      %v436 = vld [vmem:[%s349 + $0x40] sm:$0xf]
      %v437 = vld [vmem:[%s349 + $0x44] sm:$0xf]
      %v438 = vld [vmem:[%s349 + $0x48] sm:$0xf]
      %v439 = vld [vmem:[%s349 + $0x4c] sm:$0xf]
      %v440 = vld [vmem:[%s349 + $0x50] sm:$0xf]
      %v441 = vld [vmem:[%s349 + $0x54] sm:$0xf]
      %v442 = vld [vmem:[%s349 + $0x58] sm:$0xf]
      %v443 = vld [vmem:[%s349 + $0x5c] sm:$0xf]
      %v444 = vld [vmem:[%s349 + $0x60] sm:$0xf]
      %v445 = vld [vmem:[%s349 + $0x64] sm:$0xf]
      %v446 = vld [vmem:[%s349 + $0x68] sm:$0xf]
      %v447 = vld [vmem:[%s349 + $0x6c] sm:$0xf]
      %v448 = vld [vmem:[%s349 + $0x70] sm:$0xf]
      %v449 = vld [vmem:[%s349 + $0x74] sm:$0xf]
      %v450 = vld [vmem:[%s349 + $0x78] sm:$0xf]
      %v451 = vld [vmem:[%s349 + $0x7c] sm:$0xf]
      %v452 = vunpack.c.l.bf16 %v420
      %v453 = vunpack.c.l.bf16 %v421
      %v454 = vunpack.c.l.bf16 %v422
      %v455 = vunpack.c.l.bf16 %v423
      %v456 = vunpack.c.l.bf16 %v424
      %v457 = vunpack.c.l.bf16 %v425
      %v458 = vunpack.c.l.bf16 %v426
      %v459 = vunpack.c.l.bf16 %v427
      %v460 = vunpack.c.l.bf16 %v428
      %v461 = vunpack.c.l.bf16 %v429
      %v462 = vunpack.c.l.bf16 %v430
      %v463 = vunpack.c.l.bf16 %v431
      %v464 = vunpack.c.l.bf16 %v432
      %v465 = vunpack.c.l.bf16 %v433
      %v466 = vunpack.c.l.bf16 %v434
      %v467 = vunpack.c.l.bf16 %v435
      %v468 = vunpack.c.l.bf16 %v436
      %v469 = vunpack.c.l.bf16 %v437
      %v470 = vunpack.c.l.bf16 %v438
      %v471 = vunpack.c.l.bf16 %v439
      %v472 = vunpack.c.l.bf16 %v440
      %v473 = vunpack.c.l.bf16 %v441
      %v474 = vunpack.c.l.bf16 %v442
      %v475 = vunpack.c.l.bf16 %v443
      %v476 = vunpack.c.l.bf16 %v444
      %v477 = vunpack.c.l.bf16 %v445
      %v478 = vunpack.c.l.bf16 %v446
      %v479 = vunpack.c.l.bf16 %v447
      %v480 = vunpack.c.l.bf16 %v448
      %v481 = vunpack.c.l.bf16 %v449
      %v482 = vunpack.c.l.bf16 %v450
      %v483 = vunpack.c.l.bf16 %v451
      %v484 = vmul.f32 %v388, %v452
      %v485 = vmul.f32 %v389, %v453
      %v486 = vmul.f32 %v390, %v454
      %v487 = vmul.f32 %v391, %v455
      %v488 = vmul.f32 %v392, %v456
      %v489 = vmul.f32 %v393, %v457
      %v490 = vmul.f32 %v394, %v458
      %v491 = vmul.f32 %v395, %v459
      %v492 = vmul.f32 %v396, %v460
      %v493 = vmul.f32 %v397, %v461
      %v494 = vmul.f32 %v398, %v462
      %v495 = vmul.f32 %v399, %v463
      %v496 = vmul.f32 %v400, %v464
      %v497 = vmul.f32 %v401, %v465
      %v498 = vmul.f32 %v402, %v466
      %v499 = vmul.f32 %v403, %v467
      %v500 = vmul.f32 %v404, %v468
      %v501 = vmul.f32 %v405, %v469
      %v502 = vmul.f32 %v406, %v470
      %v503 = vmul.f32 %v407, %v471
      %v504 = vmul.f32 %v408, %v472
      %v505 = vmul.f32 %v409, %v473
      %v506 = vmul.f32 %v410, %v474
      %v507 = vmul.f32 %v411, %v475
      %v508 = vmul.f32 %v412, %v476
      %v509 = vmul.f32 %v413, %v477
      %v510 = vmul.f32 %v414, %v478
      %v511 = vmul.f32 %v415, %v479
      %v512 = vmul.f32 %v416, %v480
      %v513 = vmul.f32 %v417, %v481
      %v514 = vmul.f32 %v418, %v482
      %v515 = vmul.f32 %v419, %v483
      %v516 = vld [vmem:[%s7] sm:$0x1]
      %v517 = vld [vmem:[%s2] sm:$0xff]
      %v518 = vld [vmem:[%s2 + $0x8] sm:$0xff]
      %v519 = vld [vmem:[%s2 + $0x10] sm:$0xff]
      %v520 = vld [vmem:[%s2 + $0x18] sm:$0xff]
      %v521 = vld [vmem:[%s3] sm:$0xff]
      %v522 = vld [vmem:[%s3 + $0x8] sm:$0xff]
      %v523 = vld [vmem:[%s3 + $0x10] sm:$0xff]
      %v524 = vld [vmem:[%s3 + $0x18] sm:$0xff]
      %vm525 = vcmask 261120
      %v527 = vsel %vm525, %v521, 0
      %v530 = vsel %vm525, %v522, 0
      %v533 = vsel %vm525, %v523, 0
      %v536 = vsel %vm525, %v524, 0
      %v539 = vsel %vm525, %v452, 0
      %v542 = vsel %vm525, %v453, 0
      %v545 = vsel %vm525, %v454, 0
      %v548 = vsel %vm525, %v455, 0
      %v551 = vsel %vm525, %v456, 0
      %v554 = vsel %vm525, %v457, 0
      %v557 = vsel %vm525, %v458, 0
      %v560 = vsel %vm525, %v459, 0
      %v563 = vsel %vm525, %v460, 0
      %v566 = vsel %vm525, %v461, 0
      %v569 = vsel %vm525, %v462, 0
      %v572 = vsel %vm525, %v463, 0
      %v575 = vsel %vm525, %v464, 0
      %v578 = vsel %vm525, %v465, 0
      %v581 = vsel %vm525, %v466, 0
      %v584 = vsel %vm525, %v467, 0
      %v587 = vsel %vm525, %v468, 0
      %v590 = vsel %vm525, %v469, 0
      %v593 = vsel %vm525, %v470, 0
      %v596 = vsel %vm525, %v471, 0
      %v599 = vsel %vm525, %v472, 0
      %v602 = vsel %vm525, %v473, 0
      %v605 = vsel %vm525, %v474, 0
      %v608 = vsel %vm525, %v475, 0
      %v611 = vsel %vm525, %v476, 0
      %v614 = vsel %vm525, %v477, 0
      %v617 = vsel %vm525, %v478, 0
      %v620 = vsel %vm525, %v479, 0
      %v623 = vsel %vm525, %v480, 0
      %v626 = vsel %vm525, %v481, 0
      %v629 = vsel %vm525, %v482, 0
      %v632 = vsel %vm525, %v483, 0
      %634 = vmatprep.subr.mxu0 0.0
      %635 = vmatpush1.xpose.msra.mxu0 %v539
      %636 = vmatprep.subr.mxu0 0.0
      %637 = vmatpush1.xpose.msra.mxu0 %v542
      %638 = vmatprep.subr.mxu0 0.0
      %639 = vmatpush1.xpose.msra.mxu0 %v545
      %640 = vmatprep.subr.mxu0 0.0
      %641 = vmatpush1.xpose.msra.mxu0 %v548
      %642 = vmatprep.subr.mxu0 0.0
      %643 = vmatpush1.xpose.msra.mxu0 %v551
      %644 = vmatprep.subr.mxu0 0.0
      %645 = vmatpush1.xpose.msra.mxu0 %v554
      %646 = vmatprep.subr.mxu0 0.0
      %647 = vmatpush1.xpose.msra.mxu0 %v557
      %648 = vmatprep.subr.mxu0 0.0
      %649 = vmatpush1.xpose.msra.mxu0 %v560
      %650 = vmatprep.subr.mxu0 0.0
      %651 = vmatpush1.xpose.msra.mxu0 %v563
      %652 = vmatprep.subr.mxu0 0.0
      %653 = vmatpush1.xpose.msra.mxu0 %v566
      %654 = vmatprep.subr.mxu0 0.0
      %655 = vmatpush1.xpose.msra.mxu0 %v569
      %656 = vmatprep.subr.mxu0 0.0
      %657 = vmatpush1.xpose.msra.mxu0 %v572
      %658 = vmatprep.subr.mxu0 0.0
      %659 = vmatpush1.xpose.msra.mxu0 %v575
      %660 = vmatprep.subr.mxu0 0.0
      %661 = vmatpush1.xpose.msra.mxu0 %v578
      %662 = vmatprep.subr.mxu0 0.0
      %663 = vmatpush1.xpose.msra.mxu0 %v581
      %664 = vmatprep.subr.mxu0 0.0
      %665 = vmatpush1.xpose.msra.mxu0 %v584
      %666 = vmatprep.subr.mxu0 0.0
      %667 = vmatpush1.xpose.msra.mxu0 %v587
      %668 = vmatprep.subr.mxu0 0.0
      %669 = vmatpush1.xpose.msra.mxu0 %v590
      %670 = vmatprep.subr.mxu0 0.0
      %671 = vmatpush1.xpose.msra.mxu0 %v593
      %672 = vmatprep.subr.mxu0 0.0
      %673 = vmatpush1.xpose.msra.mxu0 %v596
      %674 = vmatprep.subr.mxu0 0.0
      %675 = vmatpush1.xpose.msra.mxu0 %v599
      %676 = vmatprep.subr.mxu0 0.0
      %677 = vmatpush1.xpose.msra.mxu0 %v602
      %678 = vmatprep.subr.mxu0 0.0
      %679 = vmatpush1.xpose.msra.mxu0 %v605
      %680 = vmatprep.subr.mxu0 0.0
      %681 = vmatpush1.xpose.msra.mxu0 %v608
      %682 = vmatprep.subr.mxu0 0.0
      %683 = vmatpush1.xpose.msra.mxu0 %v611
      %684 = vmatprep.subr.mxu0 0.0
      %685 = vmatpush1.xpose.msra.mxu0 %v614
      %686 = vmatprep.subr.mxu0 0.0
      %687 = vmatpush1.xpose.msra.mxu0 %v617
      %688 = vmatprep.subr.mxu0 0.0
      %689 = vmatpush1.xpose.msra.mxu0 %v620
      %690 = vmatprep.subr.mxu0 0.0
      %691 = vmatpush1.xpose.msra.mxu0 %v623
      %692 = vmatprep.subr.mxu0 0.0
      %693 = vmatpush1.xpose.msra.mxu0 %v626
      %694 = vmatprep.subr.mxu0 0.0
      %695 = vmatpush1.xpose.msra.mxu0 %v629
      %696 = vmatprep.subr.mxu0 0.0
      %697 = vmatpush1.xpose.msra.mxu0 %v632
      %698 = vmatprep.mubr.f32.mxu0 0.0
      %699 = vmatmul.mubr.f32.gmra.mrb[0].mxu0 %v527
      %v700 = vpop.f32.mrb[0].mxu0
      %v701 = vadd.f32 0.0, %v700
      %v702 = vpop.f32.mrb[0].mxu0
      %v703 = vadd.f32 0.0, %v702
      %704 = vmatprep.mubr.f32.mxu0 0.0
      %705 = vmatmul.mubr.f32.gmra.mrb[0].mxu0 %v530
      %v706 = vpop.f32.mrb[0].mxu0
      %v707 = vadd.f32 0.0, %v706
      %v708 = vpop.f32.mrb[0].mxu0
      %v709 = vadd.f32 0.0, %v708
      %710 = vmatprep.mubr.f32.mxu0 0.0
      %711 = vmatmul.mubr.f32.gmra.mrb[0].mxu0 %v533
      %v712 = vpop.f32.mrb[0].mxu0
      %v713 = vadd.f32 0.0, %v712
      %v714 = vpop.f32.mrb[0].mxu0
      %v715 = vadd.f32 0.0, %v714
      %716 = vmatprep.mubr.f32.mxu0 0.0
      %717 = vmatmul.mubr.f32.gmra.mrb[0].mxu0 %v536
      %v718 = vpop.f32.mrb[0].mxu0
      %v719 = vadd.f32 0.0, %v718
      %v720 = vpop.f32.mrb[0].mxu0
      %v721 = vadd.f32 0.0, %v720
      %722 = vdwg.mxu0
      %v724 = vsel %vm525, %v517, 0
      %v727 = vsel %vm525, %v518, 0
      %v730 = vsel %vm525, %v519, 0
      %v733 = vsel %vm525, %v520, 0
      %v736 = vsel %vm525, %v388, 0
      %v739 = vsel %vm525, %v389, 0
      %v742 = vsel %vm525, %v390, 0
      %v745 = vsel %vm525, %v391, 0
      %v748 = vsel %vm525, %v392, 0
      %v751 = vsel %vm525, %v393, 0
      %v754 = vsel %vm525, %v394, 0
      %v757 = vsel %vm525, %v395, 0
      %v760 = vsel %vm525, %v396, 0
      %v763 = vsel %vm525, %v397, 0
      %v766 = vsel %vm525, %v398, 0
      %v769 = vsel %vm525, %v399, 0
      %v772 = vsel %vm525, %v400, 0
      %v775 = vsel %vm525, %v401, 0
      %v778 = vsel %vm525, %v402, 0
      %v781 = vsel %vm525, %v403, 0
      %v784 = vsel %vm525, %v404, 0
      %v787 = vsel %vm525, %v405, 0
      %v790 = vsel %vm525, %v406, 0
      %v793 = vsel %vm525, %v407, 0
      %v796 = vsel %vm525, %v408, 0
      %v799 = vsel %vm525, %v409, 0
      %v802 = vsel %vm525, %v410, 0
      %v805 = vsel %vm525, %v411, 0
      %v808 = vsel %vm525, %v412, 0
      %v811 = vsel %vm525, %v413, 0
      %v814 = vsel %vm525, %v414, 0
      %v817 = vsel %vm525, %v415, 0
      %v820 = vsel %vm525, %v416, 0
      %v823 = vsel %vm525, %v417, 0
      %v826 = vsel %vm525, %v418, 0
      %v829 = vsel %vm525, %v419, 0
      %831 = vmatprep.subr.mxu0 0.0
      %832 = vmatpush1.xpose.msra.mxu0 %v736
      %833 = vmatprep.subr.mxu0 0.0
      %834 = vmatpush1.xpose.msra.mxu0 %v739
      %835 = vmatprep.subr.mxu0 0.0
      %836 = vmatpush1.xpose.msra.mxu0 %v742
      %837 = vmatprep.subr.mxu0 0.0
      %838 = vmatpush1.xpose.msra.mxu0 %v745
      %839 = vmatprep.subr.mxu0 0.0
      %840 = vmatpush1.xpose.msra.mxu0 %v748
      %841 = vmatprep.subr.mxu0 0.0
      %842 = vmatpush1.xpose.msra.mxu0 %v751
      %843 = vmatprep.subr.mxu0 0.0
      %844 = vmatpush1.xpose.msra.mxu0 %v754
      %845 = vmatprep.subr.mxu0 0.0
      %846 = vmatpush1.xpose.msra.mxu0 %v757
      %847 = vmatprep.subr.mxu0 0.0
      %848 = vmatpush1.xpose.msra.mxu0 %v760
      %849 = vmatprep.subr.mxu0 0.0
      %850 = vmatpush1.xpose.msra.mxu0 %v763
      %851 = vmatprep.subr.mxu0 0.0
      %852 = vmatpush1.xpose.msra.mxu0 %v766
      %853 = vmatprep.subr.mxu0 0.0
      %854 = vmatpush1.xpose.msra.mxu0 %v769
      %855 = vmatprep.subr.mxu0 0.0
      %856 = vmatpush1.xpose.msra.mxu0 %v772
      %857 = vmatprep.subr.mxu0 0.0
      %858 = vmatpush1.xpose.msra.mxu0 %v775
      %859 = vmatprep.subr.mxu0 0.0
      %860 = vmatpush1.xpose.msra.mxu0 %v778
      %861 = vmatprep.subr.mxu0 0.0
      %862 = vmatpush1.xpose.msra.mxu0 %v781
      %863 = vmatprep.subr.mxu0 0.0
      %864 = vmatpush1.xpose.msra.mxu0 %v784
      %865 = vmatprep.subr.mxu0 0.0
      %866 = vmatpush1.xpose.msra.mxu0 %v787
      %867 = vmatprep.subr.mxu0 0.0
      %868 = vmatpush1.xpose.msra.mxu0 %v790
      %869 = vmatprep.subr.mxu0 0.0
      %870 = vmatpush1.xpose.msra.mxu0 %v793
      %871 = vmatprep.subr.mxu0 0.0
      %872 = vmatpush1.xpose.msra.mxu0 %v796
      %873 = vmatprep.subr.mxu0 0.0
      %874 = vmatpush1.xpose.msra.mxu0 %v799
      %875 = vmatprep.subr.mxu0 0.0
      %876 = vmatpush1.xpose.msra.mxu0 %v802
      %877 = vmatprep.subr.mxu0 0.0
      %878 = vmatpush1.xpose.msra.mxu0 %v805
      %879 = vmatprep.subr.mxu0 0.0
      %880 = vmatpush1.xpose.msra.mxu0 %v808
      %881 = vmatprep.subr.mxu0 0.0
      %882 = vmatpush1.xpose.msra.mxu0 %v811
      %883 = vmatprep.subr.mxu0 0.0
      %884 = vmatpush1.xpose.msra.mxu0 %v814
      %885 = vmatprep.subr.mxu0 0.0
      %886 = vmatpush1.xpose.msra.mxu0 %v817
      %887 = vmatprep.subr.mxu0 0.0
      %888 = vmatpush1.xpose.msra.mxu0 %v820
      %889 = vmatprep.subr.mxu0 0.0
      %890 = vmatpush1.xpose.msra.mxu0 %v823
      %891 = vmatprep.subr.mxu0 0.0
      %892 = vmatpush1.xpose.msra.mxu0 %v826
      %893 = vmatprep.subr.mxu0 0.0
      %894 = vmatpush1.xpose.msra.mxu0 %v829
      %895 = vmatprep.mubr.f32.mxu0 0.0
      %896 = vmatmul.mubr.f32.gmra.mrb[0].mxu0 %v724
      %v897 = vpop.f32.mrb[0].mxu0
      %v898 = vadd.f32 %v701, %v897
      %v899 = vpop.f32.mrb[0].mxu0
      %v900 = vadd.f32 %v703, %v899
      %901 = vmatprep.mubr.f32.mxu0 0.0
      %902 = vmatmul.mubr.f32.gmra.mrb[0].mxu0 %v727
      %v903 = vpop.f32.mrb[0].mxu0
      %v904 = vadd.f32 %v707, %v903
      %v905 = vpop.f32.mrb[0].mxu0
      %v906 = vadd.f32 %v709, %v905
      %907 = vmatprep.mubr.f32.mxu0 0.0
      %908 = vmatmul.mubr.f32.gmra.mrb[0].mxu0 %v730
      %v909 = vpop.f32.mrb[0].mxu0
      %v910 = vadd.f32 %v713, %v909
      %v911 = vpop.f32.mrb[0].mxu0
      %v912 = vadd.f32 %v715, %v911
      %913 = vmatprep.mubr.f32.mxu0 0.0
      %914 = vmatmul.mubr.f32.gmra.mrb[0].mxu0 %v733
      %v915 = vpop.f32.mrb[0].mxu0
      %v916 = vadd.f32 %v719, %v915
      %v917 = vpop.f32.mrb[0].mxu0
      %v918 = vadd.f32 %v721, %v917
      %919 = vdwg.mxu0
      %v920 = vld [vmem:[%s4] sm:$0xff]
      %v921 = vld [vmem:[%s4 + $0x8] sm:$0xff]
      %v922 = vld [vmem:[%s4 + $0x10] sm:$0xff]
      %v923 = vld [vmem:[%s4 + $0x18] sm:$0xff]
      %925 = vset.pattern.permute.xlu0 0
      %926 = vperm.xlu0 %925, %v920
      %v927 = vpop.permute.xlu0 %926
      %930 = vset.pattern.permute.xlu0 0
      %931 = vperm.xlu0 %930, %v921
      %v932 = vpop.permute.xlu0 %931
      %935 = vset.pattern.permute.xlu0 0
      %936 = vperm.xlu0 %935, %v922
      %v937 = vpop.permute.xlu0 %936
      %940 = vset.pattern.permute.xlu0 0
      %941 = vperm.xlu0 %940, %v923
      %v942 = vpop.permute.xlu0 %941
      %v944 = vadd.f32 %v898, %v927
      %v945 = vadd.f32 %v900, %v927
      %v946 = vadd.f32 %v904, %v932
      %v947 = vadd.f32 %v906, %v932
      %v948 = vadd.f32 %v910, %v937
      %v949 = vadd.f32 %v912, %v937
      %v950 = vadd.f32 %v916, %v942
      %v951 = vadd.f32 %v918, %v942
      %v952 = vmax.f32 %v944, 0.0
      %v953 = vmax.f32 %v945, 0.0
      %v954 = vmax.f32 %v946, 0.0
      %v955 = vmax.f32 %v947, 0.0
      %v956 = vmax.f32 %v948, 0.0
      %v957 = vmax.f32 %v949, 0.0
      %v958 = vmax.f32 %v950, 0.0
      %v959 = vmax.f32 %v951, 0.0
      %v960 = vld [vmem:[%s5] sm:$0xff]
      %v961 = vld [vmem:[%s5 + $0x8] sm:$0xff]
      %v962 = vld [vmem:[%s5 + $0x10] sm:$0xff]
      %v963 = vld [vmem:[%s5 + $0x18] sm:$0xff]
      %v964 = vld [vmem:[%s6] sm:$0xff]
      %v965 = vld [vmem:[%s6 + $0x8] sm:$0xff]
      %v966 = vld [vmem:[%s6 + $0x10] sm:$0xff]
      %v967 = vld [vmem:[%s6 + $0x18] sm:$0xff]
      %969 = vset.pattern.permute.xlu0 0
      %970 = vperm.xlu0 %969, %v964
      %v971 = vpop.permute.xlu0 %970
      %974 = vset.pattern.permute.xlu0 0
      %975 = vperm.xlu0 %974, %v965
      %v976 = vpop.permute.xlu0 %975
      %979 = vset.pattern.permute.xlu0 0
      %980 = vperm.xlu0 %979, %v966
      %v981 = vpop.permute.xlu0 %980
      %984 = vset.pattern.permute.xlu0 0
      %985 = vperm.xlu0 %984, %v967
      %v986 = vpop.permute.xlu0 %985
      %v989 = vsel %vm525, %v960, 0
      %v992 = vsel %vm525, %v961, 0
      %v995 = vsel %vm525, %v962, 0
      %v998 = vsel %vm525, %v963, 0
      %1000 = vmatprep.subr.mxu0 %v953
      %1001 = vmatpush1.msra.mxu0 %v952
      %1002 = vmatprep.subr.mxu0 %v955
      %1003 = vmatpush1.msra.mxu0 %v954
      %1004 = vmatprep.subr.mxu0 %v957
      %1005 = vmatpush1.msra.mxu0 %v956
      %1006 = vmatprep.subr.mxu0 %v959
      %1007 = vmatpush1.msra.mxu0 %v958
      %1008 = vmatprep.subr.mxu0 0.0
      %1009 = vmatpush1.msra.mxu0 0.0
      %1010 = vmatprep.subr.mxu0 0.0
      %1011 = vmatpush1.msra.mxu0 0.0
      %1012 = vmatprep.subr.mxu0 0.0
      %1013 = vmatpush1.msra.mxu0 0.0
      %1014 = vmatprep.subr.mxu0 0.0
      %1015 = vmatpush1.msra.mxu0 0.0
      %1016 = vmatprep.subr.mxu0 0.0
      %1017 = vmatpush1.msra.mxu0 0.0
      %1018 = vmatprep.subr.mxu0 0.0
      %1019 = vmatpush1.msra.mxu0 0.0
      %1020 = vmatprep.subr.mxu0 0.0
      %1021 = vmatpush1.msra.mxu0 0.0
      %1022 = vmatprep.subr.mxu0 0.0
      %1023 = vmatpush1.msra.mxu0 0.0
      %1024 = vmatprep.subr.mxu0 0.0
      %1025 = vmatpush1.msra.mxu0 0.0
      %1026 = vmatprep.subr.mxu0 0.0
      %1027 = vmatpush1.msra.mxu0 0.0
      %1028 = vmatprep.subr.mxu0 0.0
      %1029 = vmatpush1.msra.mxu0 0.0
      %1030 = vmatprep.subr.mxu0 0.0
      %1031 = vmatpush1.msra.mxu0 0.0
      %1032 = vmatprep.subr.mxu0 0.0
      %1033 = vmatpush1.msra.mxu0 0.0
      %1034 = vmatprep.subr.mxu0 0.0
      %1035 = vmatpush1.msra.mxu0 0.0
      %1036 = vmatprep.subr.mxu0 0.0
      %1037 = vmatpush1.msra.mxu0 0.0
      %1038 = vmatprep.subr.mxu0 0.0
      %1039 = vmatpush1.msra.mxu0 0.0
      %1040 = vmatprep.subr.mxu0 0.0
      %1041 = vmatpush1.msra.mxu0 0.0
      %1042 = vmatprep.subr.mxu0 0.0
      %1043 = vmatpush1.msra.mxu0 0.0
      %1044 = vmatprep.subr.mxu0 0.0
      %1045 = vmatpush1.msra.mxu0 0.0
      %1046 = vmatprep.subr.mxu0 0.0
      %1047 = vmatpush1.msra.mxu0 0.0
      %1048 = vmatprep.subr.mxu0 0.0
      %1049 = vmatpush1.msra.mxu0 0.0
      %1050 = vmatprep.subr.mxu0 0.0
      %1051 = vmatpush1.msra.mxu0 0.0
      %1052 = vmatprep.subr.mxu0 0.0
      %1053 = vmatpush1.msra.mxu0 0.0
      %1054 = vmatprep.subr.mxu0 0.0
      %1055 = vmatpush1.msra.mxu0 0.0
      %1056 = vmatprep.subr.mxu0 0.0
      %1057 = vmatpush1.msra.mxu0 0.0
      %1058 = vmatprep.subr.mxu0 0.0
      %1059 = vmatpush1.msra.mxu0 0.0
      %1060 = vmatprep.subr.mxu0 0.0
      %1061 = vmatpush1.msra.mxu0 0.0
      %1062 = vmatprep.subr.mxu0 0.0
      %1063 = vmatpush1.msra.mxu0 0.0
      %1064 = vmatprep.mubr.f32.mxu0 0.0
      %1065 = vmatmul.mubr.f32.gmra.mrb[0].mxu0 %v989
      %v1066 = vpop.f32.mrb[0].mxu0
      %v1067 = vadd.f32 %v971, %v1066
      %v1068 = vpop.f32.mrb[0].mxu0
      %v1069 = vadd.f32 %v971, %v1068
      %1070 = vmatprep.mubr.f32.mxu0 0.0
      %1071 = vmatmul.mubr.f32.gmra.mrb[0].mxu0 %v992
      %v1072 = vpop.f32.mrb[0].mxu0
      %v1073 = vadd.f32 %v976, %v1072
      %v1074 = vpop.f32.mrb[0].mxu0
      %v1075 = vadd.f32 %v976, %v1074
      %1076 = vmatprep.mubr.f32.mxu0 0.0
      %1077 = vmatmul.mubr.f32.gmra.mrb[0].mxu0 %v995
      %v1078 = vpop.f32.mrb[0].mxu0
      %v1079 = vadd.f32 %v981, %v1078
      %v1080 = vpop.f32.mrb[0].mxu0
      %v1081 = vadd.f32 %v981, %v1080
      %1082 = vmatprep.mubr.f32.mxu0 0.0
      %1083 = vmatmul.mubr.f32.gmra.mrb[0].mxu0 %v998
      %v1084 = vpop.f32.mrb[0].mxu0
      %v1085 = vadd.f32 %v986, %v1084
      %v1086 = vpop.f32.mrb[0].mxu0
      %v1087 = vadd.f32 %v986, %v1086
      %1088 = vdwg.mxu0
      %v1089 = vmax.f32 %v1067, 0.0
      %v1090 = vmax.f32 %v1069, 0.0
      %v1091 = vmax.f32 %v1073, 0.0
      %v1092 = vmax.f32 %v1075, 0.0
      %v1093 = vmax.f32 %v1079, 0.0
      %v1094 = vmax.f32 %v1081, 0.0
      %v1095 = vmax.f32 %v1085, 0.0
      %v1096 = vmax.f32 %v1087, 0.0
      %v1097 = vld [vmem:[%s8] sm:$0xff]
      %v1098 = vld [vmem:[%s8 + $0x8] sm:$0xff]
      %v1099 = vld [vmem:[%s8 + $0x10] sm:$0xff]
      %v1100 = vld [vmem:[%s8 + $0x18] sm:$0xff]
      %1102 = vset.pattern.permute.xlu0 0
      %1103 = vperm.xlu0 %1102, %v1097
      %v1104 = vpop.permute.xlu0 %1103
      %1107 = vset.pattern.permute.xlu0 0
      %1108 = vperm.xlu0 %1107, %v1098
      %v1109 = vpop.permute.xlu0 %1108
      %1112 = vset.pattern.permute.xlu0 0
      %1113 = vperm.xlu0 %1112, %v1099
      %v1114 = vpop.permute.xlu0 %1113
      %1117 = vset.pattern.permute.xlu0 0
      %1118 = vperm.xlu0 %1117, %v1100
      %v1119 = vpop.permute.xlu0 %1118
      %v1121 = vmul.f32 %v1089, %v1104
      %v1122 = vmul.f32 %v1090, %v1104
      %v1123 = vmul.f32 %v1091, %v1109
      %v1124 = vmul.f32 %v1092, %v1109
      %v1125 = vmul.f32 %v1093, %v1114
      %v1126 = vmul.f32 %v1094, %v1114
      %v1127 = vmul.f32 %v1095, %v1119
      %v1128 = vmul.f32 %v1096, %v1119
      %v1129 = vadd.f32 %v1121, %v1123
      %v1130 = vadd.f32 %v1129, %v1125
      %v1131 = vadd.f32 %v1130, %v1127
      %v1132 = vrot.slane %v1131, 4
      %v1133 = vadd.f32 %v1131, %v1132
      %v1134 = vrot.slane %v1133, 2
      %v1135 = vadd.f32 %v1133, %v1134
      %v1136 = vrot.slane %v1135, 1
      %v1137 = vadd.f32 %v1135, %v1136
      %v1138 = vadd.f32 %v1122, %v1124
      %v1139 = vadd.f32 %v1138, %v1126
      %v1140 = vadd.f32 %v1139, %v1128
      %v1141 = vrot.slane %v1140, 4
      %v1142 = vadd.f32 %v1140, %v1141
      %v1143 = vrot.slane %v1142, 2
      %v1144 = vadd.f32 %v1142, %v1143
      %v1145 = vrot.slane %v1144, 1
      %v1146 = vadd.f32 %v1144, %v1145
      %v1148 = vsel %vm525, %v516, 0
      %v1151 = vsel %vm525, %v484, 0
      %v1154 = vsel %vm525, %v485, 0
      %v1157 = vsel %vm525, %v486, 0
      %v1160 = vsel %vm525, %v487, 0
      %v1163 = vsel %vm525, %v488, 0
      %v1166 = vsel %vm525, %v489, 0
      %v1169 = vsel %vm525, %v490, 0
      %v1172 = vsel %vm525, %v491, 0
      %v1175 = vsel %vm525, %v492, 0
      %v1178 = vsel %vm525, %v493, 0
      %v1181 = vsel %vm525, %v494, 0
      %v1184 = vsel %vm525, %v495, 0
      %v1187 = vsel %vm525, %v496, 0
      %v1190 = vsel %vm525, %v497, 0
      %v1193 = vsel %vm525, %v498, 0
      %v1196 = vsel %vm525, %v499, 0
      %v1199 = vsel %vm525, %v500, 0
      %v1202 = vsel %vm525, %v501, 0
      %v1205 = vsel %vm525, %v502, 0
      %v1208 = vsel %vm525, %v503, 0
      %v1211 = vsel %vm525, %v504, 0
      %v1214 = vsel %vm525, %v505, 0
      %v1217 = vsel %vm525, %v506, 0
      %v1220 = vsel %vm525, %v507, 0
      %v1223 = vsel %vm525, %v508, 0
      %v1226 = vsel %vm525, %v509, 0
      %v1229 = vsel %vm525, %v510, 0
      %v1232 = vsel %vm525, %v511, 0
      %v1235 = vsel %vm525, %v512, 0
      %v1238 = vsel %vm525, %v513, 0
      %v1241 = vsel %vm525, %v514, 0
      %v1244 = vsel %vm525, %v515, 0
      %1246 = vmatprep.subr.mxu0 0.0
      %1247 = vmatpush1.xpose.msra.mxu0 %v1151
      %1248 = vmatprep.subr.mxu0 0.0
      %1249 = vmatpush1.xpose.msra.mxu0 %v1154
      %1250 = vmatprep.subr.mxu0 0.0
      %1251 = vmatpush1.xpose.msra.mxu0 %v1157
      %1252 = vmatprep.subr.mxu0 0.0
      %1253 = vmatpush1.xpose.msra.mxu0 %v1160
      %1254 = vmatprep.subr.mxu0 0.0
      %1255 = vmatpush1.xpose.msra.mxu0 %v1163
      %1256 = vmatprep.subr.mxu0 0.0
      %1257 = vmatpush1.xpose.msra.mxu0 %v1166
      %1258 = vmatprep.subr.mxu0 0.0
      %1259 = vmatpush1.xpose.msra.mxu0 %v1169
      %1260 = vmatprep.subr.mxu0 0.0
      %1261 = vmatpush1.xpose.msra.mxu0 %v1172
      %1262 = vmatprep.subr.mxu0 0.0
      %1263 = vmatpush1.xpose.msra.mxu0 %v1175
      %1264 = vmatprep.subr.mxu0 0.0
      %1265 = vmatpush1.xpose.msra.mxu0 %v1178
      %1266 = vmatprep.subr.mxu0 0.0
      %1267 = vmatpush1.xpose.msra.mxu0 %v1181
      %1268 = vmatprep.subr.mxu0 0.0
      %1269 = vmatpush1.xpose.msra.mxu0 %v1184
      %1270 = vmatprep.subr.mxu0 0.0
      %1271 = vmatpush1.xpose.msra.mxu0 %v1187
      %1272 = vmatprep.subr.mxu0 0.0
      %1273 = vmatpush1.xpose.msra.mxu0 %v1190
      %1274 = vmatprep.subr.mxu0 0.0
      %1275 = vmatpush1.xpose.msra.mxu0 %v1193
      %1276 = vmatprep.subr.mxu0 0.0
      %1277 = vmatpush1.xpose.msra.mxu0 %v1196
      %1278 = vmatprep.subr.mxu0 0.0
      %1279 = vmatpush1.xpose.msra.mxu0 %v1199
      %1280 = vmatprep.subr.mxu0 0.0
      %1281 = vmatpush1.xpose.msra.mxu0 %v1202
      %1282 = vmatprep.subr.mxu0 0.0
      %1283 = vmatpush1.xpose.msra.mxu0 %v1205
      %1284 = vmatprep.subr.mxu0 0.0
      %1285 = vmatpush1.xpose.msra.mxu0 %v1208
      %1286 = vmatprep.subr.mxu0 0.0
      %1287 = vmatpush1.xpose.msra.mxu0 %v1211
      %1288 = vmatprep.subr.mxu0 0.0
      %1289 = vmatpush1.xpose.msra.mxu0 %v1214
      %1290 = vmatprep.subr.mxu0 0.0
      %1291 = vmatpush1.xpose.msra.mxu0 %v1217
      %1292 = vmatprep.subr.mxu0 0.0
      %1293 = vmatpush1.xpose.msra.mxu0 %v1220
      %1294 = vmatprep.subr.mxu0 0.0
      %1295 = vmatpush1.xpose.msra.mxu0 %v1223
      %1296 = vmatprep.subr.mxu0 0.0
      %1297 = vmatpush1.xpose.msra.mxu0 %v1226
      %1298 = vmatprep.subr.mxu0 0.0
      %1299 = vmatpush1.xpose.msra.mxu0 %v1229
      %1300 = vmatprep.subr.mxu0 0.0
      %1301 = vmatpush1.xpose.msra.mxu0 %v1232
      %1302 = vmatprep.subr.mxu0 0.0
      %1303 = vmatpush1.xpose.msra.mxu0 %v1235
      %1304 = vmatprep.subr.mxu0 0.0
      %1305 = vmatpush1.xpose.msra.mxu0 %v1238
      %1306 = vmatprep.subr.mxu0 0.0
      %1307 = vmatpush1.xpose.msra.mxu0 %v1241
      %1308 = vmatprep.subr.mxu0 0.0
      %1309 = vmatpush1.xpose.msra.mxu0 %v1244
      %1310 = vmatprep.mubr.f32.mxu0 0.0
      %1311 = vmatmul.mubr.f32.gmra.mrb[0].mxu0 %v1148
      %v1312 = vpop.f32.mrb[0].mxu0
      %v1313 = vadd.f32 %v1137, %v1312
      %v1314 = vpop.f32.mrb[0].mxu0
      %v1315 = vadd.f32 %v1146, %v1314
      %1316 = vdwg.mxu0
      %v1319 = vcombine.low %v1313, %v1315
      %v1321 = vunpack.c.l.s4 1966171168
      %v1322 = vunpack.c.0.s8 %v1321
      %v1323 = vlaneseq
      %v1324 = vshrl.u32 %v1323, 7
      %v1325 = vsub.s32 %v1322, %v1324
      %v1326 = vrot.slane %v1319, %v1325
      %v1328 = vunpack.c.l.s4 1966171168
      %v1329 = vunpack.c.0.s8 %v1328
      %v1330 = vlaneseq
      %v1331 = vshrl.u32 %v1330, 7
      %v1332 = vsub.s32 %v1329, %v1331
      %v1333 = vrot.slane %v1326, %v1332
      %v1335 = vlaneseq
      %vm1336 = vcmp.ge.s32.totalorder %v1335, 0
      %vm1337 = vcmp.lt.s32.totalorder %v1335, 256
      %vm1338 = vmand %vm1336, %vm1337
      %1339 = vst.msk [vmem:[%s354] sm:$0x3] %vm1338, %v1333
      %s1340 = smul.u32 2, %s20
      %p1341 = scmp.lt.s32.totalorder %s1340, 7
      %s1342 = scalar_select %p1341, %s1340, 7
      %s1343 = scalar_lea.vmem %s9, %s1342
      // Predicated region
      $region57: #{neumf_forward.1} parent=55 // pred_check
        %p1344 = pneg %p237
      $region58: #{neumf_forward.1} parent=55 // pred_check_branch
        %1346 = sbr.rel (%p1344) target = $region60
      $region59: #{neumf_forward.1} parent=55 // pred_region
        %s1347 = smul.u32 2, %s20
      $region60: #{neumf_forward.1} parent=55 // pred_fallthru
        _
    $region56: #{neumf_forward.1} parent=5 // pred_fallthru
      _
    %p1348 = scmp.le.s32.totalorder 2, %s15
    // Predicated region
    $region61: #{neumf_forward.1} parent=5 // pred_check
      %p1349 = pneg %p1348
    $region62: #{neumf_forward.1} parent=5 // pred_check_branch
      %1351 = sbr.rel (%p1349) target = $region64
    $region63: #{neumf_forward.1} parent=5 // pred_region
      %s1352 = ssub.s32 %s15, 2
      // Predicated region
      $region65: #{neumf_forward.1} parent=63 // pred_check
        %p1353 = pneg %p243
      $region66: #{neumf_forward.1} parent=63 // pred_check_branch
        %1355 = sbr.rel (%p1353) target = $region68
      $region67: #{neumf_forward.1} parent=63 // pred_region
        %s1356 = smul.u32 2, %s21
        %p1357 = scmp.lt.s32.totalorder %s1356, 7
        %s1358 = scalar_select %p1357, %s1356, 7
        %s1359 = scalar_lea.vmem %s9, %s1358
      $region68: #{neumf_forward.1} parent=63 // pred_fallthru
        _
    $region64: #{neumf_forward.1} parent=5 // pred_fallthru
      _
  $region6: #{neumf_forward.1} parent=0 // loop_footer
    %s19 = sadd.s32 1, %s15
  $region7: #{neumf_forward.1} parent=0 // loop_footer_branch
    %14 = sbr.rel target = $region3
  $region8: #{neumf_forward.1} parent=0 // loop_exit
    _

</llo_original>
